<compile_context>
chip_gen: v7x
topology: tpu7x:2x2x1
jax: 0.10.0
libtpu: 0.0.40
codegen_flags: <defaults>
</compile_context>

<pallas_src>
import functools

import jax
import jax.numpy as jnp
from jax.experimental import pallas as pl
from jax.experimental.pallas import tpu as pltpu

HIDDEN = 256   # fixed by the PyTorch module (fc1 / fc2 are 256-wide)
LANE = 128     # TPU lane width; fc3 output is padded to a multiple of this


def _round_up(x, m):
    return ((x + m - 1) // m) * m


def _choose_tb(batch, tb_max=512):
    """Largest batch tile <= tb_max, preferring >= 2 grid steps (v7x megacore)."""
    if batch <= 16:
        return max(8, _round_up(batch, 8))
    return min(tb_max, _round_up(pl.cdiv(batch, 2), 8))


def _mlp_kernel(x_ref, w1_ref, b1_ref, w2_ref, b2_ref, w3_ref, b3_ref, o_ref,
                *, out_dim):
    # x tile: (TB, inp); weights bf16 (fan_in, fan_out); biases f32 (1, fan_out).
    x = x_ref[...].astype(jnp.bfloat16)

    # fc1 + relu : bf16 MXU inputs, f32 accumulation.
    h1 = jnp.dot(x, w1_ref[...], preferred_element_type=jnp.float32) + b1_ref[...]
    h1 = jnp.maximum(h1, 0.0)

    # fc2 + relu.
    h2 = jnp.dot(h1.astype(jnp.bfloat16), w2_ref[...],
                 preferred_element_type=jnp.float32) + b2_ref[...]
    h2 = jnp.maximum(h2, 0.0)

    # fc3 (lane-padded to 128 columns; padded weight/bias columns are zero).
    logits = jnp.dot(h2.astype(jnp.bfloat16), w3_ref[...],
                     preferred_element_type=jnp.float32) + b3_ref[...]

    # Mask the padded lanes to -inf so they contribute exactly 0 to the softmax.
    lane_ids = jax.lax.broadcasted_iota(jnp.int32, logits.shape, 1)
    logits = jnp.where(lane_ids < out_dim, logits, -jnp.inf)

    # Max-stabilized softmax over the feature axis, f32 throughout.
    m = jnp.max(logits, axis=-1, keepdims=True)
    e = jnp.exp(logits - m)
    denom = jnp.sum(e, axis=-1, keepdims=True)
    # Exact reciprocal (EUP slot, still cheap). approx=True is only ~bf16-accurate.
    o_ref[...] = e * pl.reciprocal(denom, approx=False)


def action_network_forward(x, params, *, tb=None):
    """fc1->relu->fc2->relu->fc3->softmax in one Pallas kernel, tiled over batch."""
    w1, b1, w2, b2, w3, b3 = params
    B, inp = x.shape
    out_dim = w3.shape[1]
    out_pad = _round_up(max(out_dim, LANE), LANE)   # exactly 128 for out_dim <= 128

    # Lane-pad fc3 to a 128-wide output (zero columns; masked inside the kernel).
    if out_pad != out_dim:
        w3 = jnp.pad(w3, ((0, 0), (0, out_pad - out_dim)))
        b3 = jnp.pad(b3, ((0, 0), (0, out_pad - out_dim)))

    if tb is None:
        tb = _choose_tb(B)
    tb = max(8, _round_up(min(tb, _round_up(B, 8)), 8))

    grid = (pl.cdiv(B, tb),)   # trailing partial block: OOB writes are dropped

    kernel = functools.partial(_mlp_kernel, out_dim=out_dim)

    y = pl.pallas_call(
        kernel,
        out_shape=jax.ShapeDtypeStruct((B, out_pad), jnp.float32),
        grid=grid,
        in_specs=[
            # x: tiled along batch
            pl.BlockSpec((tb, inp), lambda i: (i, 0)),
            # weights/biases: VMEM-resident (index_map ignores the grid index)
            pl.BlockSpec((inp, HIDDEN), lambda i: (0, 0)),
            pl.BlockSpec((1, HIDDEN), lambda i: (0, 0)),
            pl.BlockSpec((HIDDEN, HIDDEN), lambda i: (0, 0)),
            pl.BlockSpec((1, HIDDEN), lambda i: (0, 0)),
            pl.BlockSpec((HIDDEN, out_pad), lambda i: (0, 0)),
            pl.BlockSpec((1, out_pad), lambda i: (0, 0)),
        ],
        out_specs=pl.BlockSpec((tb, out_pad), lambda i: (i, 0)),  # lane-dense store
        compiler_params=pltpu.CompilerParams(
            dimension_semantics=("parallel",),
            vmem_limit_bytes=32 * 1024 * 1024,
        ),
    )(x, w1, b1, w2, b2, w3, b3)

    return y[:, :out_dim]


def init_action_network_params(key, inp, out, hidden=HIDDEN):
    """Init mimicking torch.nn.Linear defaults; fc3 weight/bias are zeroed.

    Weights are stored pre-transposed as (fan_in, fan_out) in bf16; biases in f32.
    """
    k1, k2, k3, k4 = jax.random.split(key, 4)

    def linear_init(kw, kb, fan_in, fan_out):
        bound = 1.0 / jnp.sqrt(jnp.float32(fan_in))
        w = jax.random.uniform(kw, (fan_in, fan_out), jnp.float32, -bound, bound)
        b = jax.random.uniform(kb, (1, fan_out), jnp.float32, -bound, bound)
        return w.astype(jnp.bfloat16), b

    w1, b1 = linear_init(k1, k2, inp, hidden)
    w2, b2 = linear_init(k3, k4, hidden, hidden)
    # fc3 weight and bias are zeroed in the PyTorch module's __init__.
    w3 = jnp.zeros((hidden, out), jnp.bfloat16)
    b3 = jnp.zeros((1, out), jnp.float32)
    return (w1, b1, w2, b2, w3, b3)


def reference_forward(x, params):
    """Plain-JAX reference following the same bf16-weight / f32-accumulate path."""
    w1, b1, w2, b2, w3, b3 = params
    bf = jnp.bfloat16
    h = jnp.maximum(jnp.dot(x.astype(bf), w1.astype(bf),
                            preferred_element_type=jnp.float32) + b1, 0.0)
    h = jnp.maximum(jnp.dot(h.astype(bf), w2.astype(bf),
                            preferred_element_type=jnp.float32) + b2, 0.0)
    logits = jnp.dot(h.astype(bf), w3.astype(bf),
                     preferred_element_type=jnp.float32) + b3
    return jax.nn.softmax(logits, axis=1)


if __name__ == "__main__":
    inp, out = 32, 8
    batch = 256   # TB=128 -> grid of 2 tiles (pipelining, weight residency, 2 TCs)

    key = jax.random.PRNGKey(0)
    k_params, k_x, k_w3, k_b3 = jax.random.split(key, 4)

    params = init_action_network_params(k_params, inp, out)
    x = jax.random.normal(k_x, (batch, inp), jnp.float32)

    # 1) As-initialized module: fc3 is zero -> softmax output is exactly uniform.
    y0 = jax.block_until_ready(action_network_forward(x, params))
    assert y0.shape == (batch, out)
    assert jnp.allclose(y0, 1.0 / out, atol=1e-5)
    assert jnp.allclose(jnp.sum(y0, axis=1), 1.0, atol=1e-5)

    # 2) Non-zero fc3 (as after training) -> compare against plain-JAX reference.
    w1, b1, w2, b2, _, _ = params
    w3 = (0.1 * jax.random.normal(k_w3, (HIDDEN, out), jnp.float32)).astype(jnp.bfloat16)
    b3 = 0.1 * jax.random.normal(k_b3, (1, out), jnp.float32)
    params_trained = (w1, b1, w2, b2, w3, b3)

    y = jax.block_until_ready(action_network_forward(x, params_trained))
    ref = reference_forward(x, params_trained)
    assert y.shape == (batch, out)
    assert jnp.allclose(jnp.sum(y, axis=1), 1.0, atol=1e-4)
    assert jnp.allclose(y, ref, atol=5e-3, rtol=5e-3)

    # 3) Ragged batch (B not a multiple of the tile) -> trailing partial block,
    #    no wrapper-side padding pass over x.
    xr = x[:50]
    yr = jax.block_until_ready(action_network_forward(xr, params_trained))
    assert yr.shape == (50, out)
    assert jnp.allclose(yr, reference_forward(xr, params_trained), atol=5e-3, rtol=5e-3)

    # 4) Tiny batch (single partial tile) with bf16 x accepted directly.
    xt = x[:2].astype(jnp.bfloat16)
    yt = jax.block_until_ready(action_network_forward(xt, params_trained))
    assert yt.shape == (2, out)
    assert jnp.allclose(yt, reference_forward(x[:2], params_trained), atol=5e-3, rtol=5e-3)

    print("KERNEL_OK")
</pallas_src>

<mosaic_0001>
module attributes {stable_mosaic.version = 11 : i64} {
  func.func @_mlp_kernel(%arg0: i32, %arg1: memref<128x32xf32, #tpu.memory_space<vmem>>, %arg2: memref<32x256xbf16, #tpu.memory_space<vmem>>, %arg3: memref<1x256xf32, #tpu.memory_space<vmem>>, %arg4: memref<256x256xbf16, #tpu.memory_space<vmem>>, %arg5: memref<1x256xf32, #tpu.memory_space<vmem>>, %arg6: memref<256x128xbf16, #tpu.memory_space<vmem>>, %arg7: memref<1x128xf32, #tpu.memory_space<vmem>>, %arg8: memref<128x128xf32, #tpu.memory_space<vmem>>) attributes {dimension_semantics = [#tpu.dimension_semantics<parallel>], iteration_bounds = array<i64: 2>, scalar_prefetch = 0 : i64, scratch_operands = 0 : i64, tpu.core_type = #tpu.core_type<tc>, window_params = [{transform_indices = @transform_0, window_bounds = array<i64: 128, 32>}, {pipeline_mode = #tpu.pipeline_mode<synchronous>, transform_indices = @transform_1, window_bounds = array<i64: 32, 256>}, {pipeline_mode = #tpu.pipeline_mode<synchronous>, transform_indices = @transform_2, window_bounds = array<i64: 1, 256>}, {pipeline_mode = #tpu.pipeline_mode<synchronous>, transform_indices = @transform_3, window_bounds = array<i64: 256, 256>}, {pipeline_mode = #tpu.pipeline_mode<synchronous>, transform_indices = @transform_4, window_bounds = array<i64: 1, 256>}, {pipeline_mode = #tpu.pipeline_mode<synchronous>, transform_indices = @transform_5, window_bounds = array<i64: 256, 128>}, {pipeline_mode = #tpu.pipeline_mode<synchronous>, transform_indices = @transform_6, window_bounds = array<i64: 1, 128>}, {transform_indices = @transform_7, window_bounds = array<i64: 128, 128>}]} {
    %c0 = arith.constant 0 : index
    %c0_0 = arith.constant 0 : index
    %0 = vector.load %arg1[%c0, %c0_0] : memref<128x32xf32, #tpu.memory_space<vmem>>, vector<128x32xf32>
    %1 = arith.truncf %0 : vector<128x32xf32> to vector<128x32xbf16>
    %c0_1 = arith.constant 0 : index
    %c0_2 = arith.constant 0 : index
    %2 = vector.load %arg2[%c0_1, %c0_2] : memref<32x256xbf16, #tpu.memory_space<vmem>>, vector<32x256xbf16>
    %cst = arith.constant dense<0.000000e+00> : vector<128x256xf32>
    %3 = tpu.matmul %1, %2, %cst {dimension_numbers = #tpu.dot_dimension_numbers<[1], [0], [0], [1], [0, 0, 1, 1], [], []>} : vector<128x32xbf16>, vector<32x256xbf16>, vector<128x256xf32> -> vector<128x256xf32>
    %c0_3 = arith.constant 0 : index
    %c0_4 = arith.constant 0 : index
    %4 = vector.load %arg3[%c0_3, %c0_4] : memref<1x256xf32, #tpu.memory_space<vmem>>, vector<1x256xf32>
    %5 = vector.broadcast %4 : vector<1x256xf32> to vector<128x256xf32>
    %6 = arith.addf %3, %5 : vector<128x256xf32>
    %cst_5 = arith.constant 0.000000e+00 : f32
    %7 = vector.broadcast %cst_5 : f32 to vector<128x256xf32>
    %8 = arith.maximumf %6, %7 : vector<128x256xf32>
    %9 = arith.truncf %8 : vector<128x256xf32> to vector<128x256xbf16>
    %c0_6 = arith.constant 0 : index
    %c0_7 = arith.constant 0 : index
    %10 = vector.load %arg4[%c0_6, %c0_7] : memref<256x256xbf16, #tpu.memory_space<vmem>>, vector<256x256xbf16>
    %cst_8 = arith.constant dense<0.000000e+00> : vector<128x256xf32>
    %11 = tpu.matmul %9, %10, %cst_8 {dimension_numbers = #tpu.dot_dimension_numbers<[1], [0], [0], [1], [0, 0, 1, 1], [], []>} : vector<128x256xbf16>, vector<256x256xbf16>, vector<128x256xf32> -> vector<128x256xf32>
    %c0_9 = arith.constant 0 : index
    %c0_10 = arith.constant 0 : index
    %12 = vector.load %arg5[%c0_9, %c0_10] : memref<1x256xf32, #tpu.memory_space<vmem>>, vector<1x256xf32>
    %13 = vector.broadcast %12 : vector<1x256xf32> to vector<128x256xf32>
    %14 = arith.addf %11, %13 : vector<128x256xf32>
    %cst_11 = arith.constant 0.000000e+00 : f32
    %15 = vector.broadcast %cst_11 : f32 to vector<128x256xf32>
    %16 = arith.maximumf %14, %15 : vector<128x256xf32>
    %17 = arith.truncf %16 : vector<128x256xf32> to vector<128x256xbf16>
    %c0_12 = arith.constant 0 : index
    %c0_13 = arith.constant 0 : index
    %18 = vector.load %arg6[%c0_12, %c0_13] : memref<256x128xbf16, #tpu.memory_space<vmem>>, vector<256x128xbf16>
    %cst_14 = arith.constant dense<0.000000e+00> : vector<128x128xf32>
    %19 = tpu.matmul %17, %18, %cst_14 {dimension_numbers = #tpu.dot_dimension_numbers<[1], [0], [0], [1], [0, 0, 1, 1], [], []>} : vector<128x256xbf16>, vector<256x128xbf16>, vector<128x128xf32> -> vector<128x128xf32>
    %c0_15 = arith.constant 0 : index
    %c0_16 = arith.constant 0 : index
    %20 = vector.load %arg7[%c0_15, %c0_16] : memref<1x128xf32, #tpu.memory_space<vmem>>, vector<1x128xf32>
    %21 = vector.broadcast %20 : vector<1x128xf32> to vector<128x128xf32>
    %22 = arith.addf %19, %21 : vector<128x128xf32>
    %23 = tpu.iota {dimensions = array<i32: 1>} : vector<128x128xi32>
    %c8_i32 = arith.constant 8 : i32
    %24 = vector.broadcast %c8_i32 : i32 to vector<128x128xi32>
    %25 = arith.cmpi slt, %23, %24 : vector<128x128xi32>
    %cst_17 = arith.constant 0xFF800000 : f32
    %26 = vector.broadcast %cst_17 : f32 to vector<128x128xf32>
    %27 = arith.select %25, %22, %26 : vector<128x128xi1>, vector<128x128xf32>
    %cst_18 = arith.constant dense<0xFF800000> : vector<128xf32>
    %28 = vector.multi_reduction <maximumf>, %27, %cst_18 [1] : vector<128x128xf32> to vector<128xf32>
    %29 = vector.shape_cast %28 : vector<128xf32> to vector<128x1xf32>
    %30 = vector.broadcast %29 : vector<128x1xf32> to vector<128x128xf32>
    %31 = arith.subf %27, %30 : vector<128x128xf32>
    %32 = math.exp %31 : vector<128x128xf32>
    %cst_19 = arith.constant dense<0.000000e+00> : vector<128xf32>
    %33 = vector.multi_reduction <add>, %32, %cst_19 [1] : vector<128x128xf32> to vector<128xf32>
    %34 = vector.shape_cast %33 : vector<128xf32> to vector<128x1xf32>
    %35 = tpu.reciprocal %34 : vector<128x1xf32> -> vector<128x1xf32>
    %36 = vector.broadcast %35 : vector<128x1xf32> to vector<128x128xf32>
    %37 = arith.mulf %32, %36 : vector<128x128xf32>
    %c0_20 = arith.constant 0 : index
    %c0_21 = arith.constant 0 : index
    %38 = vector.load %arg8[%c0_20, %c0_21] : memref<128x128xf32, #tpu.memory_space<vmem>>, vector<128x128xf32>
    tpu.vector_store %arg8[%c0_20, %c0_21], %37 {strides = array<i32>} : memref<128x128xf32, #tpu.memory_space<vmem>>, vector<128x128xf32>,
    return
  }
  func.func @transform_0(%arg0: i32) -> (i32, i32) {
    %c0_i32 = arith.constant 0 : i32
    %c0_i32_0 = arith.constant 0 : i32
    return %arg0, %c0_i32 : i32, i32
  }
  func.func @transform_1(%arg0: i32) -> (i32, i32) {
    %c0_i32 = arith.constant 0 : i32
    %c0_i32_0 = arith.constant 0 : i32
    %c0_i32_1 = arith.constant 0 : i32
    return %c0_i32, %c0_i32_0 : i32, i32
  }
  func.func @transform_2(%arg0: i32) -> (i32, i32) {
    %c0_i32 = arith.constant 0 : i32
    %c0_i32_0 = arith.constant 0 : i32
    %c0_i32_1 = arith.constant 0 : i32
    return %c0_i32, %c0_i32_0 : i32, i32
  }
  func.func @transform_3(%arg0: i32) -> (i32, i32) {
    %c0_i32 = arith.constant 0 : i32
    %c0_i32_0 = arith.constant 0 : i32
    %c0_i32_1 = arith.constant 0 : i32
    return %c0_i32, %c0_i32_0 : i32, i32
  }
  func.func @transform_4(%arg0: i32) -> (i32, i32) {
    %c0_i32 = arith.constant 0 : i32
    %c0_i32_0 = arith.constant 0 : i32
    %c0_i32_1 = arith.constant 0 : i32
    return %c0_i32, %c0_i32_0 : i32, i32
  }
  func.func @transform_5(%arg0: i32) -> (i32, i32) {
    %c0_i32 = arith.constant 0 : i32
    %c0_i32_0 = arith.constant 0 : i32
    %c0_i32_1 = arith.constant 0 : i32
    return %c0_i32, %c0_i32_0 : i32, i32
  }
  func.func @transform_6(%arg0: i32) -> (i32, i32) {
    %c0_i32 = arith.constant 0 : i32
    %c0_i32_0 = arith.constant 0 : i32
    %c0_i32_1 = arith.constant 0 : i32
    return %c0_i32, %c0_i32_0 : i32, i32
  }
  func.func @transform_7(%arg0: i32) -> (i32, i32) {
    %c0_i32 = arith.constant 0 : i32
    %c0_i32_0 = arith.constant 0 : i32
    return %arg0, %c0_i32 : i32, i32
  }
}

</mosaic_0001>

<llo_original>
// kernel: tpu_custom_call.1
$region0: #{tpu_custom_call.1}
  #allocation0 [shape = 'u32[]', space=smem, size = 0x4, offset = 0x4, fixed_abs, tag = 'smem constant byte address 0x4 - core index']
  #allocation1 [shape = 'u32[144,128]{1,0:T(1,128)}', space=vmem, size = 0x12000, scoped, tag = 'internal scratch']
  %s0 = inlined_call_operand.vmem [shape: f32[256,32], index: 0, kind: input, shape index: {}]
  %s1 = inlined_call_operand.vmem [shape: bf16[32,256], index: 1, kind: input, shape index: {}]
  %s2 = inlined_call_operand.vmem [shape: f32[1,256], index: 2, kind: input, shape index: {}]
  %s3 = inlined_call_operand.vmem [shape: bf16[256,256], index: 3, kind: input, shape index: {}]
  %s4 = inlined_call_operand.vmem [shape: f32[1,256], index: 4, kind: input, shape index: {}]
  %s5 = inlined_call_operand.hbm [shape: bf16[256,128], index: 5, kind: input, shape index: {}]
  %s6 = inlined_call_operand.vmem [shape: f32[1,128], index: 6, kind: input, shape index: {}]
  %s7 = inlined_call_operand.hbm [shape: f32[256,128], index: 7, kind: output, shape index: {}]
  %s8 = sld [smem:[#allocation0]]
  $region65: #{tpu_custom_call.1} parent=0
    _
  %s10 = ssub.s32 1, %s8
  %s11 = scalar_select 0, %s10, %s8
  $region1: #{tpu_custom_call.1} parent=0
    #allocation2 [shape = 'u8[65536]{0}', space=vmem, size = 0x10000, scoped, tag = 'input window, operand 5, single buffered']
    #allocation3 [shape = 's32[2]{0}', space=sflag, size = 0x8, scoped, tag = 'scoped memory for tpu_custom_call.1']
    #allocation4 [shape = 's32[2]{0}', space=sflag, size = 0x8, scoped, tag = 'scoped memory for tpu_custom_call.1']
    #allocation5 [shape = 'u8[131072]{0}', space=vmem, size = 0x20000, scoped, tag = 'output window, operand 0']
    %12 = vsyncpa [#allocation3], 0
    %13 = vsyncpa [#allocation4], 0
    %s14 = scalar_lea.sflag [#allocation4], 1
    %15 = vsyncpa %s14, 0
    loop: start=0, step=1, limit=4
    $region2: #{tpu_custom_call.1} parent=1 // loop_pre_header
      _
    $region3: #{tpu_custom_call.1} parent=1 // loop_header
      %s17 = sphi 0, %s21
      %p18 = scmp.ge.s32.totalorder %s17, 4
      %s27 = sphi 0, %s29
      %s30 = sphi 0, %s27
      %s31 = sphi 0, %s30
      %s47 = sphi 0, %s31
      %s51 = sphi 0, %s51
      %s53 = sphi 0, %s51
      %s54 = sphi 0, %s53
      %s68 = sphi 0, %s54
      %s72 = sphi 0, %s72
      %s74 = sphi 0, %s72
      %s75 = sphi 0, %s74
      %s89 = sphi 0, %s75
      %s93 = sphi 0, %s93
      %s95 = sphi 0, %s93
      %s96 = sphi 0, %s95
      %s110 = sphi 0, %s96
      %s114 = sphi 0, %s114
      %s116 = sphi 0, %s114
      %s117 = sphi 0, %s116
      %s131 = sphi 0, %s117
      %s135 = sphi 0, %s135
      %s137 = sphi 0, %s135
      %s138 = sphi 0, %s137
      %s152 = sphi 0, %s138
      %s156 = sphi 0, %s156
      %s158 = sphi 0, %s156
      %s159 = sphi 0, %s158
      %s173 = sphi 0, %s159
      %s179 = sphi 0, %s181
      %s182 = sphi 0, %s179
      %s183 = sphi 0, %s182
      %s199 = sphi 0, %s183
    $region4: #{tpu_custom_call.1} parent=1 // loop_header_branch
      %20 = sbr.rel (%p18) target = $region8
    $region5: #{tpu_custom_call.1} parent=1 // loop_body
      %s22 = ssub.s32 %s17, 1
      %s23 = ssub.s32 %s17, 2
      %s24 = sadd.s32 %s17, 1
      %s25 = ssub.s32 %s17, %s24
      %p26 = scmp.eq.s32.totalorder %s25, 0
      %s28 = sadd.s32 %s27, 1
      %s29 = scalar_select %p26, %s27, %s28
      %p32 = pneg %p26
      %p33 = scmp.eq.s32.totalorder %s17, 1
      %p34 = por %p32, %p33
      %p35 = scmp.ne.s32.totalorder %s27, %s30
      %p36 = scmp.eq.s32.totalorder %s17, 0
      %p37 = por %p35, %p36
      %p38 = scmp.ne.s32.totalorder %s27, %s30
      %p39 = scmp.eq.s32.totalorder %s22, 1
      %p40 = por %p38, %p39
      %p41 = scmp.ne.s32.totalorder %s30, %s31
      %p42 = scmp.eq.s32.totalorder %s22, 0
      %p43 = por %p41, %p42
      %p44 = scmp.ne.s32.totalorder %s30, %s31
      %p45 = scmp.eq.s32.totalorder %s23, 1
      %p46 = por %p44, %p45
      %p48 = scmp.ne.s32.totalorder %s31, %s47
      %p49 = scmp.eq.s32.totalorder %s23, 0
      %p50 = por %p48, %p49
      %s52 = sadd.s32 %s51, 1
      %p55 = scmp.eq.s32.totalorder %s17, 1
      %p56 = scmp.ne.s32.totalorder %s51, %s53
      %p57 = scmp.eq.s32.totalorder %s17, 0
      %p58 = por %p56, %p57
      %p59 = scmp.ne.s32.totalorder %s51, %s53
      %p60 = scmp.eq.s32.totalorder %s22, 1
      %p61 = por %p59, %p60
      %p62 = scmp.ne.s32.totalorder %s53, %s54
      %p63 = scmp.eq.s32.totalorder %s22, 0
      %p64 = por %p62, %p63
      %p65 = scmp.ne.s32.totalorder %s53, %s54
      %p66 = scmp.eq.s32.totalorder %s23, 1
      %p67 = por %p65, %p66
      %p69 = scmp.ne.s32.totalorder %s54, %s68
      %p70 = scmp.eq.s32.totalorder %s23, 0
      %p71 = por %p69, %p70
      %s73 = sadd.s32 %s72, 1
      %p76 = scmp.eq.s32.totalorder %s17, 1
      %p77 = scmp.ne.s32.totalorder %s72, %s74
      %p78 = scmp.eq.s32.totalorder %s17, 0
      %p79 = por %p77, %p78
      %p80 = scmp.ne.s32.totalorder %s72, %s74
      %p81 = scmp.eq.s32.totalorder %s22, 1
      %p82 = por %p80, %p81
      %p83 = scmp.ne.s32.totalorder %s74, %s75
      %p84 = scmp.eq.s32.totalorder %s22, 0
      %p85 = por %p83, %p84
      %p86 = scmp.ne.s32.totalorder %s74, %s75
      %p87 = scmp.eq.s32.totalorder %s23, 1
      %p88 = por %p86, %p87
      %p90 = scmp.ne.s32.totalorder %s75, %s89
      %p91 = scmp.eq.s32.totalorder %s23, 0
      %p92 = por %p90, %p91
      %s94 = sadd.s32 %s93, 1
      %p97 = scmp.eq.s32.totalorder %s17, 1
      %p98 = scmp.ne.s32.totalorder %s93, %s95
      %p99 = scmp.eq.s32.totalorder %s17, 0
      %p100 = por %p98, %p99
      %p101 = scmp.ne.s32.totalorder %s93, %s95
      %p102 = scmp.eq.s32.totalorder %s22, 1
      %p103 = por %p101, %p102
      %p104 = scmp.ne.s32.totalorder %s95, %s96
      %p105 = scmp.eq.s32.totalorder %s22, 0
      %p106 = por %p104, %p105
      %p107 = scmp.ne.s32.totalorder %s95, %s96
      %p108 = scmp.eq.s32.totalorder %s23, 1
      %p109 = por %p107, %p108
      %p111 = scmp.ne.s32.totalorder %s96, %s110
      %p112 = scmp.eq.s32.totalorder %s23, 0
      %p113 = por %p111, %p112
      %s115 = sadd.s32 %s114, 1
      %p118 = scmp.eq.s32.totalorder %s17, 1
      %p119 = scmp.ne.s32.totalorder %s114, %s116
      %p120 = scmp.eq.s32.totalorder %s17, 0
      %p121 = por %p119, %p120
      %p122 = scmp.ne.s32.totalorder %s114, %s116
      %p123 = scmp.eq.s32.totalorder %s22, 1
      %p124 = por %p122, %p123
      %p125 = scmp.ne.s32.totalorder %s116, %s117
      %p126 = scmp.eq.s32.totalorder %s22, 0
      %p127 = por %p125, %p126
      %p128 = scmp.ne.s32.totalorder %s116, %s117
      %p129 = scmp.eq.s32.totalorder %s23, 1
      %p130 = por %p128, %p129
      %p132 = scmp.ne.s32.totalorder %s117, %s131
      %p133 = scmp.eq.s32.totalorder %s23, 0
      %p134 = por %p132, %p133
      %s136 = sadd.s32 %s135, 1
      %p139 = scmp.eq.s32.totalorder %s17, 1
      %p140 = scmp.ne.s32.totalorder %s135, %s137
      %p141 = scmp.eq.s32.totalorder %s17, 0
      %p142 = por %p140, %p141
      %p143 = scmp.ne.s32.totalorder %s135, %s137
      %p144 = scmp.eq.s32.totalorder %s22, 1
      %p145 = por %p143, %p144
      %p146 = scmp.ne.s32.totalorder %s137, %s138
      %p147 = scmp.eq.s32.totalorder %s22, 0
      %p148 = por %p146, %p147
      %p149 = scmp.ne.s32.totalorder %s137, %s138
      %p150 = scmp.eq.s32.totalorder %s23, 1
      %p151 = por %p149, %p150
      %p153 = scmp.ne.s32.totalorder %s138, %s152
      %p154 = scmp.eq.s32.totalorder %s23, 0
      %p155 = por %p153, %p154
      %s157 = sadd.s32 %s156, 1
      %p160 = scmp.eq.s32.totalorder %s17, 1
      %p161 = scmp.ne.s32.totalorder %s156, %s158
      %p162 = scmp.eq.s32.totalorder %s17, 0
      %p163 = por %p161, %p162
      %p164 = scmp.ne.s32.totalorder %s156, %s158
      %p165 = scmp.eq.s32.totalorder %s22, 1
      %p166 = por %p164, %p165
      %p167 = scmp.ne.s32.totalorder %s158, %s159
      %p168 = scmp.eq.s32.totalorder %s22, 0
      %p169 = por %p167, %p168
      %p170 = scmp.ne.s32.totalorder %s158, %s159
      %p171 = scmp.eq.s32.totalorder %s23, 1
      %p172 = por %p170, %p171
      %p174 = scmp.ne.s32.totalorder %s159, %s173
      %p175 = scmp.eq.s32.totalorder %s23, 0
      %p176 = por %p174, %p175
      %s177 = ssub.s32 %s17, %s24
      %p178 = scmp.eq.s32.totalorder %s177, 0
      %s180 = sadd.s32 %s179, 1
      %s181 = scalar_select %p178, %s179, %s180
      %p184 = pneg %p178
      %p185 = scmp.eq.s32.totalorder %s17, 1
      %p186 = por %p184, %p185
      %p187 = scmp.ne.s32.totalorder %s179, %s182
      %p188 = scmp.eq.s32.totalorder %s17, 0
      %p189 = por %p187, %p188
      %p190 = scmp.ne.s32.totalorder %s179, %s182
      %p191 = scmp.eq.s32.totalorder %s22, 1
      %p192 = por %p190, %p191
      %p193 = scmp.ne.s32.totalorder %s182, %s183
      %p194 = scmp.eq.s32.totalorder %s22, 0
      %p195 = por %p193, %p194
      %p196 = scmp.ne.s32.totalorder %s182, %s183
      %p197 = scmp.eq.s32.totalorder %s23, 1
      %p198 = por %p196, %p197
      %p200 = scmp.ne.s32.totalorder %s183, %s199
      %p201 = scmp.eq.s32.totalorder %s23, 0
      %p202 = por %p200, %p201
      %p203 = scmp.le.s32.totalorder 1, %s17
      %p204 = scmp.lt.s32.totalorder %s17, 3
      %p205 = pnand %p203, %p204
      %p206 = pneg %p205
      // Predicated region
      $region9: #{tpu_custom_call.1} parent=5 // pred_check
        _
      $region10: #{tpu_custom_call.1} parent=5 // pred_check_branch
        %208 = sbr.rel (%p205) target = $region12
      $region11: #{tpu_custom_call.1} parent=5 // pred_region
        %s209 = ssub.s32 %s17, 1
        // Predicated region
        $region13: #{tpu_custom_call.1} parent=11 // pred_check
          %p210 = pneg %p64
        $region14: #{tpu_custom_call.1} parent=11 // pred_check_branch
          %212 = sbr.rel (%p210) target = $region16
        $region15: #{tpu_custom_call.1} parent=11 // pred_region
          _
        $region16: #{tpu_custom_call.1} parent=11 // pred_fallthru
          _
        // Predicated region
        $region17: #{tpu_custom_call.1} parent=11 // pred_check
          %p213 = pneg %p85
        $region18: #{tpu_custom_call.1} parent=11 // pred_check_branch
          %215 = sbr.rel (%p213) target = $region20
        $region19: #{tpu_custom_call.1} parent=11 // pred_region
          _
        $region20: #{tpu_custom_call.1} parent=11 // pred_fallthru
          _
        // Predicated region
        $region21: #{tpu_custom_call.1} parent=11 // pred_check
          %p216 = pneg %p106
        $region22: #{tpu_custom_call.1} parent=11 // pred_check_branch
          %218 = sbr.rel (%p216) target = $region24
        $region23: #{tpu_custom_call.1} parent=11 // pred_region
          _
        $region24: #{tpu_custom_call.1} parent=11 // pred_fallthru
          _
        // Predicated region
        $region25: #{tpu_custom_call.1} parent=11 // pred_check
          %p219 = pneg %p127
        $region26: #{tpu_custom_call.1} parent=11 // pred_check_branch
          %221 = sbr.rel (%p219) target = $region28
        $region27: #{tpu_custom_call.1} parent=11 // pred_region
          _
        $region28: #{tpu_custom_call.1} parent=11 // pred_fallthru
          _
        // Predicated region
        $region29: #{tpu_custom_call.1} parent=11 // pred_check
          %p222 = pneg %p148
        $region30: #{tpu_custom_call.1} parent=11 // pred_check_branch
          %224 = sbr.rel (%p222) target = $region32
        $region31: #{tpu_custom_call.1} parent=11 // pred_region
          %s226 = ssub.s32 2048, 2048
          %227 = vsyncadd [#allocation3], %s226
          %s228 = sshll.u32 [#allocation2], 4
          %s229 = int_to_ptr.vmem [resolvable:$true] %s228
          %234 = dma.hbm_to_vmem [thread:$0]  %s5, 2048, %s229, [#allocation3], 64, 64, 4
        $region32: #{tpu_custom_call.1} parent=11 // pred_fallthru
          _
        // Predicated region
        $region33: #{tpu_custom_call.1} parent=11 // pred_check
          %p235 = pneg %p169
        $region34: #{tpu_custom_call.1} parent=11 // pred_check_branch
          %237 = sbr.rel (%p235) target = $region36
        $region35: #{tpu_custom_call.1} parent=11 // pred_region
          _
        $region36: #{tpu_custom_call.1} parent=11 // pred_fallthru
          _
      $region12: #{tpu_custom_call.1} parent=5 // pred_fallthru
        _
      %p238 = scmp.lt.s32.totalorder %s17, 2
      // Predicated region
      $region37: #{tpu_custom_call.1} parent=5 // pred_check
        %p239 = pneg %p238
      $region38: #{tpu_custom_call.1} parent=5 // pred_check_branch
        %241 = sbr.rel (%p239) target = $region40
      $region39: #{tpu_custom_call.1} parent=5 // pred_region
        // Predicated region
        $region41: #{tpu_custom_call.1} parent=39 // pred_check
          %p242 = pneg %p37
        $region42: #{tpu_custom_call.1} parent=39 // pred_check_branch
          %244 = sbr.rel (%p242) target = $region44
        $region43: #{tpu_custom_call.1} parent=39 // pred_region
          %s245 = smul.u32 16, %s17
          %p246 = scmp.lt.s32.totalorder %s245, 31
          %s247 = scalar_select %p246, %s245, 31
          %s248 = smul.addr %s247, 8
          %s249 = scalar_lea.vmem %s0, %s248
          %s250 = smul.u32 16, %s17
        $region44: #{tpu_custom_call.1} parent=39 // pred_fallthru
          _
      $region40: #{tpu_custom_call.1} parent=5 // pred_fallthru
        _
      %p251 = scmp.le.s32.totalorder 1, %s17
      %p252 = scmp.lt.s32.totalorder %s17, 3
      %p253 = pnand %p251, %p252
      %p254 = pneg %p253
      // Predicated region
      $region45: #{tpu_custom_call.1} parent=5 // pred_check
        _
      $region46: #{tpu_custom_call.1} parent=5 // pred_check_branch
        %256 = sbr.rel (%p253) target = $region48
      $region47: #{tpu_custom_call.1} parent=5 // pred_region
        %s257 = ssub.s32 %s17, 1
        // Predicated region
        $region49: #{tpu_custom_call.1} parent=47 // pred_check
          %p258 = pneg %p148
        $region50: #{tpu_custom_call.1} parent=47 // pred_check_branch
          %260 = sbr.rel (%p258) target = $region52
        $region51: #{tpu_custom_call.1} parent=47 // pred_region
          %261 = dma.done [#allocation3], 2048
        $region52: #{tpu_custom_call.1} parent=47 // pred_fallthru
          _
        %s262 = smul.u32 16, %s22
        %p263 = scmp.lt.s32.totalorder %s262, 31
        %s264 = scalar_select %p263, %s262, 31
        %s265 = smul.addr %s264, 8
        %s266 = scalar_lea.vmem %s0, %s265
        %p267 = pneg %p43
        %p268 = pneg %p40
        %p269 = pneg %p64
        %p270 = pneg %p61
        %p271 = pneg %p85
        %p272 = pneg %p82
        %p273 = pneg %p106
        %p274 = pneg %p103
        %p275 = pneg %p127
        %p276 = pneg %p124
        %p277 = pneg %p148
        %p278 = pneg %p145
        %p279 = pneg %p169
        %p280 = pneg %p166
        %p281 = pneg %p195
        %p282 = pneg %p192
        %s283 = sand.u32 %s182, 1
        %s284 = scalar_lea.sflag [#allocation4], %s283
        %s285 = sand.u32 %s182, 1
        %s286 = smul.addr %s285, 128
        %s287 = scalar_lea.vmem [#allocation5], %s286
        %s288 = smul.u32 16, %s22
        %p289 = scmp.lt.s32.totalorder %s288, 31
        %s290 = scalar_select %p289, %s288, 31
        %s291 = smul.addr %s290, 8
        %s292 = scalar_lea.vmem %s0, %s291
        %s293 = smul.u32 16, %s22
        %s294 = smul.u32 16, %s22
        %v296 = vld [vmem:[%s292] sm:$0xff]
        %v297 = vld [vmem:[%s292 + $0x8] sm:$0xff]
        %v298 = vld [vmem:[%s292 + $0x10] sm:$0xff]
        %v299 = vld [vmem:[%s292 + $0x18] sm:$0xff]
        %v300 = vld [vmem:[%s292 + $0x20] sm:$0xff]
        %v301 = vld [vmem:[%s292 + $0x28] sm:$0xff]
        %v302 = vld [vmem:[%s292 + $0x30] sm:$0xff]
        %v303 = vld [vmem:[%s292 + $0x38] sm:$0xff]
        %v304 = vld [vmem:[%s292 + $0x40] sm:$0xff]
        %v305 = vld [vmem:[%s292 + $0x48] sm:$0xff]
        %v306 = vld [vmem:[%s292 + $0x50] sm:$0xff]
        %v307 = vld [vmem:[%s292 + $0x58] sm:$0xff]
        %v308 = vld [vmem:[%s292 + $0x60] sm:$0xff]
        %v309 = vld [vmem:[%s292 + $0x68] sm:$0xff]
        %v310 = vld [vmem:[%s292 + $0x70] sm:$0xff]
        %v311 = vld [vmem:[%s292 + $0x78] sm:$0xff]
        %v312 = vpack.c.bf16 %v297, %v296
        %v313 = vpack.c.bf16 %v299, %v298
        %v314 = vpack.c.bf16 %v301, %v300
        %v315 = vpack.c.bf16 %v303, %v302
        %v316 = vpack.c.bf16 %v305, %v304
        %v317 = vpack.c.bf16 %v307, %v306
        %v318 = vpack.c.bf16 %v309, %v308
        %v319 = vpack.c.bf16 %v311, %v310
        %v320 = vld [vmem:[%s1] sm:$0xff]
        %v321 = vld [vmem:[%s1 + $0x8] sm:$0xff]
        %v322 = vld [vmem:[%s1 + $0x10] sm:$0xff]
        %v323 = vld [vmem:[%s1 + $0x18] sm:$0xff]
        %v324 = vld [vmem:[%s2] sm:$0x3]
        %v326 = vlaneseq
        %v327 = vshrl.u32 %v326, 7
        %v328 = vsub.s32 0, %v327
        %v329 = vrot.slane %v324, %v328
        %v330 = vlaneseq
        %v331 = vshrl.u32 %v330, 7
        %v332 = vsub.s32 1, %v331
        %v333 = vrot.slane %v324, %v332
        %v340 = vunpack.c.l.b16 %v320
        %v341 = vunpack.c.h.b16 %v320
        %v342 = vunpack.c.l.b16 %v321
        %v343 = vunpack.c.h.b16 %v321
        %v344 = vunpack.c.l.b16 %v322
        %v345 = vunpack.c.h.b16 %v322
        %v346 = vunpack.c.l.b16 %v323
        %v347 = vunpack.c.h.b16 %v323
        %v348 = vpack.c.b16 %v342, %v340
        %v349 = vpack.c.b16 %v343, %v341
        %v350 = vpack.c.b16 %v346, %v344
        %v351 = vpack.c.b16 %v347, %v345
        %vm356 = vcmask 261120
        %v358 = vsel %vm356, %v312, 0
        %v361 = vsel %vm356, %v313, 0
        %v364 = vsel %vm356, %v314, 0
        %v367 = vsel %vm356, %v315, 0
        %v370 = vsel %vm356, %v316, 0
        %v373 = vsel %vm356, %v317, 0
        %v376 = vsel %vm356, %v318, 0
        %v379 = vsel %vm356, %v319, 0
        %381 = vmatprep.subr.bf16.mxu0 %v349
        %382 = vmatpush1.bf16.msra.mxu0 %v348
        %383 = vmatprep.subr.bf16.mxu0 %v351
        %384 = vmatpush1.bf16.msra.mxu0 %v350
        %385 = vmatprep.subr.bf16.mxu0 0
        %386 = vmatpush1.bf16.msra.mxu0 0
        %387 = vmatprep.subr.bf16.mxu0 0
        %388 = vmatpush1.bf16.msra.mxu0 0
        %389 = vmatprep.subr.bf16.mxu0 0
        %390 = vmatpush1.bf16.msra.mxu0 0
        %391 = vmatprep.subr.bf16.mxu0 0
        %392 = vmatpush1.bf16.msra.mxu0 0
        %393 = vmatprep.subr.bf16.mxu0 0
        %394 = vmatpush1.bf16.msra.mxu0 0
        %395 = vmatprep.subr.bf16.mxu0 0
        %396 = vmatpush1.bf16.msra.mxu0 0
        %397 = vmatprep.subr.bf16.mxu0 0
        %398 = vmatpush1.bf16.msra.mxu0 0
        %399 = vmatprep.subr.bf16.mxu0 0
        %400 = vmatpush1.bf16.msra.mxu0 0
        %401 = vmatprep.subr.bf16.mxu0 0
        %402 = vmatpush1.bf16.msra.mxu0 0
        %403 = vmatprep.subr.bf16.mxu0 0
        %404 = vmatpush1.bf16.msra.mxu0 0
        %405 = vmatprep.subr.bf16.mxu0 0
        %406 = vmatpush1.bf16.msra.mxu0 0
        %407 = vmatprep.subr.bf16.mxu0 0
        %408 = vmatpush1.bf16.msra.mxu0 0
        %409 = vmatprep.subr.bf16.mxu0 0
        %410 = vmatpush1.bf16.msra.mxu0 0
        %411 = vmatprep.subr.bf16.mxu0 0
        %412 = vmatpush1.bf16.msra.mxu0 0
        %413 = vmatprep.mubr.bf16.mxu0 0
        %414 = vmatmul.mubr.bf16.gmra.mrb[0].mxu0 %v358
        %v415 = vpop.f32.mrb[0].mxu0
        %v416 = vadd.f32 %v329, %v415
        %v417 = vpop.f32.mrb[0].mxu0
        %v418 = vadd.f32 %v333, %v417
        %v419 = vpop.f32.mrb[0].mxu0
        %v420 = vadd.f32 %v329, %v419
        %v421 = vpop.f32.mrb[0].mxu0
        %v422 = vadd.f32 %v333, %v421
        %423 = vmatprep.mubr.bf16.mxu0 0
        %424 = vmatmul.mubr.bf16.gmra.mrb[0].mxu0 %v361
        %v425 = vpop.f32.mrb[0].mxu0
        %v426 = vadd.f32 %v329, %v425
        %v427 = vpop.f32.mrb[0].mxu0
        %v428 = vadd.f32 %v333, %v427
        %v429 = vpop.f32.mrb[0].mxu0
        %v430 = vadd.f32 %v329, %v429
        %v431 = vpop.f32.mrb[0].mxu0
        %v432 = vadd.f32 %v333, %v431
        %433 = vmatprep.mubr.bf16.mxu0 0
        %434 = vmatmul.mubr.bf16.gmra.mrb[0].mxu0 %v364
        %v435 = vpop.f32.mrb[0].mxu0
        %v436 = vadd.f32 %v329, %v435
        %v437 = vpop.f32.mrb[0].mxu0
        %v438 = vadd.f32 %v333, %v437
        %v439 = vpop.f32.mrb[0].mxu0
        %v440 = vadd.f32 %v329, %v439
        %v441 = vpop.f32.mrb[0].mxu0
        %v442 = vadd.f32 %v333, %v441
        %443 = vmatprep.mubr.bf16.mxu0 0
        %444 = vmatmul.mubr.bf16.gmra.mrb[0].mxu0 %v367
        %v445 = vpop.f32.mrb[0].mxu0
        %v446 = vadd.f32 %v329, %v445
        %v447 = vpop.f32.mrb[0].mxu0
        %v448 = vadd.f32 %v333, %v447
        %v449 = vpop.f32.mrb[0].mxu0
        %v450 = vadd.f32 %v329, %v449
        %v451 = vpop.f32.mrb[0].mxu0
        %v452 = vadd.f32 %v333, %v451
        %453 = vmatprep.mubr.bf16.mxu0 0
        %454 = vmatmul.mubr.bf16.gmra.mrb[0].mxu0 %v370
        %v455 = vpop.f32.mrb[0].mxu0
        %v456 = vadd.f32 %v329, %v455
        %v457 = vpop.f32.mrb[0].mxu0
        %v458 = vadd.f32 %v333, %v457
        %v459 = vpop.f32.mrb[0].mxu0
        %v460 = vadd.f32 %v329, %v459
        %v461 = vpop.f32.mrb[0].mxu0
        %v462 = vadd.f32 %v333, %v461
        %463 = vmatprep.mubr.bf16.mxu0 0
        %464 = vmatmul.mubr.bf16.gmra.mrb[0].mxu0 %v373
        %v465 = vpop.f32.mrb[0].mxu0
        %v466 = vadd.f32 %v329, %v465
        %v467 = vpop.f32.mrb[0].mxu0
        %v468 = vadd.f32 %v333, %v467
        %v469 = vpop.f32.mrb[0].mxu0
        %v470 = vadd.f32 %v329, %v469
        %v471 = vpop.f32.mrb[0].mxu0
        %v472 = vadd.f32 %v333, %v471
        %473 = vmatprep.mubr.bf16.mxu0 0
        %474 = vmatmul.mubr.bf16.gmra.mrb[0].mxu0 %v376
        %v475 = vpop.f32.mrb[0].mxu0
        %v476 = vadd.f32 %v329, %v475
        %v477 = vpop.f32.mrb[0].mxu0
        %v478 = vadd.f32 %v333, %v477
        %v479 = vpop.f32.mrb[0].mxu0
        %v480 = vadd.f32 %v329, %v479
        %v481 = vpop.f32.mrb[0].mxu0
        %v482 = vadd.f32 %v333, %v481
        %483 = vmatprep.mubr.bf16.mxu0 0
        %484 = vmatmul.mubr.bf16.gmra.mrb[0].mxu0 %v379
        %v485 = vpop.f32.mrb[0].mxu0
        %v486 = vadd.f32 %v329, %v485
        %v487 = vpop.f32.mrb[0].mxu0
        %v488 = vadd.f32 %v333, %v487
        %v489 = vpop.f32.mrb[0].mxu0
        %v490 = vadd.f32 %v329, %v489
        %v491 = vpop.f32.mrb[0].mxu0
        %v492 = vadd.f32 %v333, %v491
        %493 = vdwg.mxu0
        %v494 = vmax.f32 %v416, 0.0
        %v495 = vmax.f32 %v418, 0.0
        %v496 = vmax.f32 %v420, 0.0
        %v497 = vmax.f32 %v422, 0.0
        %v498 = vmax.f32 %v426, 0.0
        %v499 = vmax.f32 %v428, 0.0
        %v500 = vmax.f32 %v430, 0.0
        %v501 = vmax.f32 %v432, 0.0
        %v502 = vmax.f32 %v436, 0.0
        %v503 = vmax.f32 %v438, 0.0
        %v504 = vmax.f32 %v440, 0.0
        %v505 = vmax.f32 %v442, 0.0
        %v506 = vmax.f32 %v446, 0.0
        %v507 = vmax.f32 %v448, 0.0
        %v508 = vmax.f32 %v450, 0.0
        %v509 = vmax.f32 %v452, 0.0
        %v510 = vmax.f32 %v456, 0.0
        %v511 = vmax.f32 %v458, 0.0
        %v512 = vmax.f32 %v460, 0.0
        %v513 = vmax.f32 %v462, 0.0
        %v514 = vmax.f32 %v466, 0.0
        %v515 = vmax.f32 %v468, 0.0
        %v516 = vmax.f32 %v470, 0.0
        %v517 = vmax.f32 %v472, 0.0
        %v518 = vmax.f32 %v476, 0.0
        %v519 = vmax.f32 %v478, 0.0
        %v520 = vmax.f32 %v480, 0.0
        %v521 = vmax.f32 %v482, 0.0
        %v522 = vmax.f32 %v486, 0.0
        %v523 = vmax.f32 %v488, 0.0
        %v524 = vmax.f32 %v490, 0.0
        %v525 = vmax.f32 %v492, 0.0
        %v526 = vpack.c.bf16 %v496, %v494
        %v527 = vpack.c.bf16 %v497, %v495
        %v528 = vpack.c.bf16 %v500, %v498
        %v529 = vpack.c.bf16 %v501, %v499
        %v530 = vpack.c.bf16 %v504, %v502
        %v531 = vpack.c.bf16 %v505, %v503
        %v532 = vpack.c.bf16 %v508, %v506
        %v533 = vpack.c.bf16 %v509, %v507
        %v534 = vpack.c.bf16 %v512, %v510
        %v535 = vpack.c.bf16 %v513, %v511
        %v536 = vpack.c.bf16 %v516, %v514
        %v537 = vpack.c.bf16 %v517, %v515
        %v538 = vpack.c.bf16 %v520, %v518
        %v539 = vpack.c.bf16 %v521, %v519
        %v540 = vpack.c.bf16 %v524, %v522
        %v541 = vpack.c.bf16 %v525, %v523
        %v542 = vld [vmem:[%s3] sm:$0xff]
        %v543 = vld [vmem:[%s3 + $0x8] sm:$0xff]
        %v544 = vld [vmem:[%s3 + $0x10] sm:$0xff]
        %v545 = vld [vmem:[%s3 + $0x18] sm:$0xff]
        %v546 = vld [vmem:[%s3 + $0x20] sm:$0xff]
        %v547 = vld [vmem:[%s3 + $0x28] sm:$0xff]
        %v548 = vld [vmem:[%s3 + $0x30] sm:$0xff]
        %v549 = vld [vmem:[%s3 + $0x38] sm:$0xff]
        %v550 = vld [vmem:[%s3 + $0x40] sm:$0xff]
        %v551 = vld [vmem:[%s3 + $0x48] sm:$0xff]
        %v552 = vld [vmem:[%s3 + $0x50] sm:$0xff]
        %v553 = vld [vmem:[%s3 + $0x58] sm:$0xff]
        %v554 = vld [vmem:[%s3 + $0x60] sm:$0xff]
        %v555 = vld [vmem:[%s3 + $0x68] sm:$0xff]
        %v556 = vld [vmem:[%s3 + $0x70] sm:$0xff]
        %v557 = vld [vmem:[%s3 + $0x78] sm:$0xff]
        %v558 = vld [vmem:[%s3 + $0x80] sm:$0xff]
        %v559 = vld [vmem:[%s3 + $0x88] sm:$0xff]
        %v560 = vld [vmem:[%s3 + $0x90] sm:$0xff]
        %v561 = vld [vmem:[%s3 + $0x98] sm:$0xff]
        %v562 = vld [vmem:[%s3 + $0xa0] sm:$0xff]
        %v563 = vld [vmem:[%s3 + $0xa8] sm:$0xff]
        %v564 = vld [vmem:[%s3 + $0xb0] sm:$0xff]
        %v565 = vld [vmem:[%s3 + $0xb8] sm:$0xff]
        %v566 = vld [vmem:[%s3 + $0xc0] sm:$0xff]
        %v567 = vld [vmem:[%s3 + $0xc8] sm:$0xff]
        %v568 = vld [vmem:[%s3 + $0xd0] sm:$0xff]
        %v569 = vld [vmem:[%s3 + $0xd8] sm:$0xff]
        %v570 = vld [vmem:[%s3 + $0xe0] sm:$0xff]
        %v571 = vld [vmem:[%s3 + $0xe8] sm:$0xff]
        %v572 = vld [vmem:[%s3 + $0xf0] sm:$0xff]
        %v573 = vld [vmem:[%s3 + $0xf8] sm:$0xff]
        %v574 = vld [vmem:[%s4] sm:$0x3]
        %v576 = vlaneseq
        %v577 = vshrl.u32 %v576, 7
        %v578 = vsub.s32 0, %v577
        %v579 = vrot.slane %v574, %v578
        %v580 = vlaneseq
        %v581 = vshrl.u32 %v580, 7
        %v582 = vsub.s32 1, %v581
        %v583 = vrot.slane %v574, %v582
        %v618 = vunpack.c.l.b16 %v542
        %v619 = vunpack.c.h.b16 %v542
        %v620 = vunpack.c.l.b16 %v543
        %v621 = vunpack.c.h.b16 %v543
        %v622 = vunpack.c.l.b16 %v544
        %v623 = vunpack.c.h.b16 %v544
        %v624 = vunpack.c.l.b16 %v545
        %v625 = vunpack.c.h.b16 %v545
        %v626 = vunpack.c.l.b16 %v546
        %v627 = vunpack.c.h.b16 %v546
        %v628 = vunpack.c.l.b16 %v547
        %v629 = vunpack.c.h.b16 %v547
        %v630 = vunpack.c.l.b16 %v548
        %v631 = vunpack.c.h.b16 %v548
        %v632 = vunpack.c.l.b16 %v549
        %v633 = vunpack.c.h.b16 %v549
        %v634 = vunpack.c.l.b16 %v550
        %v635 = vunpack.c.h.b16 %v550
        %v636 = vunpack.c.l.b16 %v551
        %v637 = vunpack.c.h.b16 %v551
        %v638 = vunpack.c.l.b16 %v552
        %v639 = vunpack.c.h.b16 %v552
        %v640 = vunpack.c.l.b16 %v553
        %v641 = vunpack.c.h.b16 %v553
        %v642 = vunpack.c.l.b16 %v554
        %v643 = vunpack.c.h.b16 %v554
        %v644 = vunpack.c.l.b16 %v555
        %v645 = vunpack.c.h.b16 %v555
        %v646 = vunpack.c.l.b16 %v556
        %v647 = vunpack.c.h.b16 %v556
        %v648 = vunpack.c.l.b16 %v557
        %v649 = vunpack.c.h.b16 %v557
        %v650 = vunpack.c.l.b16 %v558
        %v651 = vunpack.c.h.b16 %v558
        %v652 = vunpack.c.l.b16 %v559
        %v653 = vunpack.c.h.b16 %v559
        %v654 = vunpack.c.l.b16 %v560
        %v655 = vunpack.c.h.b16 %v560
        %v656 = vunpack.c.l.b16 %v561
        %v657 = vunpack.c.h.b16 %v561
        %v658 = vunpack.c.l.b16 %v562
        %v659 = vunpack.c.h.b16 %v562
        %v660 = vunpack.c.l.b16 %v563
        %v661 = vunpack.c.h.b16 %v563
        %v662 = vunpack.c.l.b16 %v564
        %v663 = vunpack.c.h.b16 %v564
        %v664 = vunpack.c.l.b16 %v565
        %v665 = vunpack.c.h.b16 %v565
        %v666 = vunpack.c.l.b16 %v566
        %v667 = vunpack.c.h.b16 %v566
        %v668 = vunpack.c.l.b16 %v567
        %v669 = vunpack.c.h.b16 %v567
        %v670 = vunpack.c.l.b16 %v568
        %v671 = vunpack.c.h.b16 %v568
        %v672 = vunpack.c.l.b16 %v569
        %v673 = vunpack.c.h.b16 %v569
        %v674 = vunpack.c.l.b16 %v570
        %v675 = vunpack.c.h.b16 %v570
        %v676 = vunpack.c.l.b16 %v571
        %v677 = vunpack.c.h.b16 %v571
        %v678 = vunpack.c.l.b16 %v572
        %v679 = vunpack.c.h.b16 %v572
        %v680 = vunpack.c.l.b16 %v573
        %v681 = vunpack.c.h.b16 %v573
        %v682 = vpack.c.b16 %v620, %v618
        %v683 = vpack.c.b16 %v621, %v619
        %v684 = vpack.c.b16 %v624, %v622
        %v685 = vpack.c.b16 %v625, %v623
        %v686 = vpack.c.b16 %v628, %v626
        %v687 = vpack.c.b16 %v629, %v627
        %v688 = vpack.c.b16 %v632, %v630
        %v689 = vpack.c.b16 %v633, %v631
        %v690 = vpack.c.b16 %v636, %v634
        %v691 = vpack.c.b16 %v637, %v635
        %v692 = vpack.c.b16 %v640, %v638
        %v693 = vpack.c.b16 %v641, %v639
        %v694 = vpack.c.b16 %v644, %v642
        %v695 = vpack.c.b16 %v645, %v643
        %v696 = vpack.c.b16 %v648, %v646
        %v697 = vpack.c.b16 %v649, %v647
        %v698 = vpack.c.b16 %v652, %v650
        %v699 = vpack.c.b16 %v653, %v651
        %v700 = vpack.c.b16 %v656, %v654
        %v701 = vpack.c.b16 %v657, %v655
        %v702 = vpack.c.b16 %v660, %v658
        %v703 = vpack.c.b16 %v661, %v659
        %v704 = vpack.c.b16 %v664, %v662
        %v705 = vpack.c.b16 %v665, %v663
        %v706 = vpack.c.b16 %v668, %v666
        %v707 = vpack.c.b16 %v669, %v667
        %v708 = vpack.c.b16 %v672, %v670
        %v709 = vpack.c.b16 %v673, %v671
        %v710 = vpack.c.b16 %v676, %v674
        %v711 = vpack.c.b16 %v677, %v675
        %v712 = vpack.c.b16 %v680, %v678
        %v713 = vpack.c.b16 %v681, %v679
        %746 = vmatprep.subr.bf16.mxu0 %v683
        %747 = vmatpush1.bf16.msra.mxu0 %v682
        %748 = vmatprep.subr.bf16.mxu0 %v685
        %749 = vmatpush1.bf16.msra.mxu0 %v684
        %750 = vmatprep.subr.bf16.mxu0 %v687
        %751 = vmatpush1.bf16.msra.mxu0 %v686
        %752 = vmatprep.subr.bf16.mxu0 %v689
        %753 = vmatpush1.bf16.msra.mxu0 %v688
        %754 = vmatprep.subr.bf16.mxu0 %v691
        %755 = vmatpush1.bf16.msra.mxu0 %v690
        %756 = vmatprep.subr.bf16.mxu0 %v693
        %757 = vmatpush1.bf16.msra.mxu0 %v692
        %758 = vmatprep.subr.bf16.mxu0 %v695
        %759 = vmatpush1.bf16.msra.mxu0 %v694
        %760 = vmatprep.subr.bf16.mxu0 %v697
        %761 = vmatpush1.bf16.msra.mxu0 %v696
        %762 = vmatprep.subr.bf16.mxu0 %v699
        %763 = vmatpush1.bf16.msra.mxu0 %v698
        %764 = vmatprep.subr.bf16.mxu0 %v701
        %765 = vmatpush1.bf16.msra.mxu0 %v700
        %766 = vmatprep.subr.bf16.mxu0 %v703
        %767 = vmatpush1.bf16.msra.mxu0 %v702
        %768 = vmatprep.subr.bf16.mxu0 %v705
        %769 = vmatpush1.bf16.msra.mxu0 %v704
        %770 = vmatprep.subr.bf16.mxu0 %v707
        %771 = vmatpush1.bf16.msra.mxu0 %v706
        %772 = vmatprep.subr.bf16.mxu0 %v709
        %773 = vmatpush1.bf16.msra.mxu0 %v708
        %774 = vmatprep.subr.bf16.mxu0 %v711
        %775 = vmatpush1.bf16.msra.mxu0 %v710
        %776 = vmatprep.subr.bf16.mxu0 %v713
        %777 = vmatpush1.bf16.msra.mxu0 %v712
        %778 = vmatprep.mubr.bf16.mxu0 %v527
        %779 = vmatmul.mubr.bf16.gmra.mrb[0].mxu0 %v526
        %v780 = vpop.f32.mrb[0].mxu0
        %v781 = vadd.f32 %v579, %v780
        %v782 = vpop.f32.mrb[0].mxu0
        %v783 = vadd.f32 %v583, %v782
        %v784 = vpop.f32.mrb[0].mxu0
        %v785 = vadd.f32 %v579, %v784
        %v786 = vpop.f32.mrb[0].mxu0
        %v787 = vadd.f32 %v583, %v786
        %788 = vmatprep.mubr.bf16.mxu0 %v529
        %789 = vmatmul.mubr.bf16.gmra.mrb[0].mxu0 %v528
        %v790 = vpop.f32.mrb[0].mxu0
        %v791 = vadd.f32 %v579, %v790
        %v792 = vpop.f32.mrb[0].mxu0
        %v793 = vadd.f32 %v583, %v792
        %v794 = vpop.f32.mrb[0].mxu0
        %v795 = vadd.f32 %v579, %v794
        %v796 = vpop.f32.mrb[0].mxu0
        %v797 = vadd.f32 %v583, %v796
        %798 = vmatprep.mubr.bf16.mxu0 %v531
        %799 = vmatmul.mubr.bf16.gmra.mrb[0].mxu0 %v530
        %v800 = vpop.f32.mrb[0].mxu0
        %v801 = vadd.f32 %v579, %v800
        %v802 = vpop.f32.mrb[0].mxu0
        %v803 = vadd.f32 %v583, %v802
        %v804 = vpop.f32.mrb[0].mxu0
        %v805 = vadd.f32 %v579, %v804
        %v806 = vpop.f32.mrb[0].mxu0
        %v807 = vadd.f32 %v583, %v806
        %808 = vmatprep.mubr.bf16.mxu0 %v533
        %809 = vmatmul.mubr.bf16.gmra.mrb[0].mxu0 %v532
        %v810 = vpop.f32.mrb[0].mxu0
        %v811 = vadd.f32 %v579, %v810
        %v812 = vpop.f32.mrb[0].mxu0
        %v813 = vadd.f32 %v583, %v812
        %v814 = vpop.f32.mrb[0].mxu0
        %v815 = vadd.f32 %v579, %v814
        %v816 = vpop.f32.mrb[0].mxu0
        %v817 = vadd.f32 %v583, %v816
        %818 = vmatprep.mubr.bf16.mxu0 %v535
        %819 = vmatmul.mubr.bf16.gmra.mrb[0].mxu0 %v534
        %v820 = vpop.f32.mrb[0].mxu0
        %v821 = vadd.f32 %v579, %v820
        %v822 = vpop.f32.mrb[0].mxu0
        %v823 = vadd.f32 %v583, %v822
        %v824 = vpop.f32.mrb[0].mxu0
        %v825 = vadd.f32 %v579, %v824
        %v826 = vpop.f32.mrb[0].mxu0
        %v827 = vadd.f32 %v583, %v826
        %828 = vmatprep.mubr.bf16.mxu0 %v537
        %829 = vmatmul.mubr.bf16.gmra.mrb[0].mxu0 %v536
        %v830 = vpop.f32.mrb[0].mxu0
        %v831 = vadd.f32 %v579, %v830
        %v832 = vpop.f32.mrb[0].mxu0
        %v833 = vadd.f32 %v583, %v832
        %v834 = vpop.f32.mrb[0].mxu0
        %v835 = vadd.f32 %v579, %v834
        %v836 = vpop.f32.mrb[0].mxu0
        %v837 = vadd.f32 %v583, %v836
        %838 = vmatprep.mubr.bf16.mxu0 %v539
        %839 = vmatmul.mubr.bf16.gmra.mrb[0].mxu0 %v538
        %v840 = vpop.f32.mrb[0].mxu0
        %v841 = vadd.f32 %v579, %v840
        %v842 = vpop.f32.mrb[0].mxu0
        %v843 = vadd.f32 %v583, %v842
        %v844 = vpop.f32.mrb[0].mxu0
        %v845 = vadd.f32 %v579, %v844
        %v846 = vpop.f32.mrb[0].mxu0
        %v847 = vadd.f32 %v583, %v846
        %848 = vmatprep.mubr.bf16.mxu0 %v541
        %849 = vmatmul.mubr.bf16.gmra.mrb[0].mxu0 %v540
        %v850 = vpop.f32.mrb[0].mxu0
        %v851 = vadd.f32 %v579, %v850
        %v852 = vpop.f32.mrb[0].mxu0
        %v853 = vadd.f32 %v583, %v852
        %v854 = vpop.f32.mrb[0].mxu0
        %v855 = vadd.f32 %v579, %v854
        %v856 = vpop.f32.mrb[0].mxu0
        %v857 = vadd.f32 %v583, %v856
        %858 = vdwg.mxu0
        %v859 = vmax.f32 %v781, 0.0
        %v860 = vmax.f32 %v783, 0.0
        %v861 = vmax.f32 %v785, 0.0
        %v862 = vmax.f32 %v787, 0.0
        %v863 = vmax.f32 %v791, 0.0
        %v864 = vmax.f32 %v793, 0.0
        %v865 = vmax.f32 %v795, 0.0
        %v866 = vmax.f32 %v797, 0.0
        %v867 = vmax.f32 %v801, 0.0
        %v868 = vmax.f32 %v803, 0.0
        %v869 = vmax.f32 %v805, 0.0
        %v870 = vmax.f32 %v807, 0.0
        %v871 = vmax.f32 %v811, 0.0
        %v872 = vmax.f32 %v813, 0.0
        %v873 = vmax.f32 %v815, 0.0
        %v874 = vmax.f32 %v817, 0.0
        %v875 = vmax.f32 %v821, 0.0
        %v876 = vmax.f32 %v823, 0.0
        %v877 = vmax.f32 %v825, 0.0
        %v878 = vmax.f32 %v827, 0.0
        %v879 = vmax.f32 %v831, 0.0
        %v880 = vmax.f32 %v833, 0.0
        %v881 = vmax.f32 %v835, 0.0
        %v882 = vmax.f32 %v837, 0.0
        %v883 = vmax.f32 %v841, 0.0
        %v884 = vmax.f32 %v843, 0.0
        %v885 = vmax.f32 %v845, 0.0
        %v886 = vmax.f32 %v847, 0.0
        %v887 = vmax.f32 %v851, 0.0
        %v888 = vmax.f32 %v853, 0.0
        %v889 = vmax.f32 %v855, 0.0
        %v890 = vmax.f32 %v857, 0.0
        %v891 = vpack.c.bf16 %v861, %v859
        %v892 = vpack.c.bf16 %v862, %v860
        %v893 = vpack.c.bf16 %v865, %v863
        %v894 = vpack.c.bf16 %v866, %v864
        %v895 = vpack.c.bf16 %v869, %v867
        %v896 = vpack.c.bf16 %v870, %v868
        %v897 = vpack.c.bf16 %v873, %v871
        %v898 = vpack.c.bf16 %v874, %v872
        %v899 = vpack.c.bf16 %v877, %v875
        %v900 = vpack.c.bf16 %v878, %v876
        %v901 = vpack.c.bf16 %v881, %v879
        %v902 = vpack.c.bf16 %v882, %v880
        %v903 = vpack.c.bf16 %v885, %v883
        %v904 = vpack.c.bf16 %v886, %v884
        %v905 = vpack.c.bf16 %v889, %v887
        %v906 = vpack.c.bf16 %v890, %v888
        %v907 = vld [vmem:[#allocation2] sm:$0xf]
        %v908 = vld [vmem:[#allocation2 + $0x4] sm:$0xf]
        %v909 = vld [vmem:[#allocation2 + $0x8] sm:$0xf]
        %v910 = vld [vmem:[#allocation2 + $0xc] sm:$0xf]
        %v911 = vld [vmem:[#allocation2 + $0x10] sm:$0xf]
        %v912 = vld [vmem:[#allocation2 + $0x14] sm:$0xf]
        %v913 = vld [vmem:[#allocation2 + $0x18] sm:$0xf]
        %v914 = vld [vmem:[#allocation2 + $0x1c] sm:$0xf]
        %v915 = vld [vmem:[#allocation2 + $0x20] sm:$0xf]
        %v916 = vld [vmem:[#allocation2 + $0x24] sm:$0xf]
        %v917 = vld [vmem:[#allocation2 + $0x28] sm:$0xf]
        %v918 = vld [vmem:[#allocation2 + $0x2c] sm:$0xf]
        %v919 = vld [vmem:[#allocation2 + $0x30] sm:$0xf]
        %v920 = vld [vmem:[#allocation2 + $0x34] sm:$0xf]
        %v921 = vld [vmem:[#allocation2 + $0x38] sm:$0xf]
        %v922 = vld [vmem:[#allocation2 + $0x3c] sm:$0xf]
        %v923 = vld [vmem:[#allocation2 + $0x40] sm:$0xf]
        %v924 = vld [vmem:[#allocation2 + $0x44] sm:$0xf]
        %v925 = vld [vmem:[#allocation2 + $0x48] sm:$0xf]
        %v926 = vld [vmem:[#allocation2 + $0x4c] sm:$0xf]
        %v927 = vld [vmem:[#allocation2 + $0x50] sm:$0xf]
        %v928 = vld [vmem:[#allocation2 + $0x54] sm:$0xf]
        %v929 = vld [vmem:[#allocation2 + $0x58] sm:$0xf]
        %v930 = vld [vmem:[#allocation2 + $0x5c] sm:$0xf]
        %v931 = vld [vmem:[#allocation2 + $0x60] sm:$0xf]
        %v932 = vld [vmem:[#allocation2 + $0x64] sm:$0xf]
        %v933 = vld [vmem:[#allocation2 + $0x68] sm:$0xf]
        %v934 = vld [vmem:[#allocation2 + $0x6c] sm:$0xf]
        %v935 = vld [vmem:[#allocation2 + $0x70] sm:$0xf]
        %v936 = vld [vmem:[#allocation2 + $0x74] sm:$0xf]
        %v937 = vld [vmem:[#allocation2 + $0x78] sm:$0xf]
        %v938 = vld [vmem:[#allocation2 + $0x7c] sm:$0xf]
        %v939 = vld [vmem:[%s6] sm:$0x1]
        %v941 = vlaneseq
        %v942 = vshrl.u32 %v941, 7
        %v943 = vsub.s32 0, %v942
        %v944 = vrot.slane %v939, %v943
        %v978 = vunpack.c.l.b16 %v907
        %v979 = vunpack.c.l.b16 %v908
        %v980 = vunpack.c.l.b16 %v909
        %v981 = vunpack.c.l.b16 %v910
        %v982 = vunpack.c.l.b16 %v911
        %v983 = vunpack.c.l.b16 %v912
        %v984 = vunpack.c.l.b16 %v913
        %v985 = vunpack.c.l.b16 %v914
        %v986 = vunpack.c.l.b16 %v915
        %v987 = vunpack.c.l.b16 %v916
        %v988 = vunpack.c.l.b16 %v917
        %v989 = vunpack.c.l.b16 %v918
        %v990 = vunpack.c.l.b16 %v919
        %v991 = vunpack.c.l.b16 %v920
        %v992 = vunpack.c.l.b16 %v921
        %v993 = vunpack.c.l.b16 %v922
        %v994 = vunpack.c.l.b16 %v923
        %v995 = vunpack.c.l.b16 %v924
        %v996 = vunpack.c.l.b16 %v925
        %v997 = vunpack.c.l.b16 %v926
        %v998 = vunpack.c.l.b16 %v927
        %v999 = vunpack.c.l.b16 %v928
        %v1000 = vunpack.c.l.b16 %v929
        %v1001 = vunpack.c.l.b16 %v930
        %v1002 = vunpack.c.l.b16 %v931
        %v1003 = vunpack.c.l.b16 %v932
        %v1004 = vunpack.c.l.b16 %v933
        %v1005 = vunpack.c.l.b16 %v934
        %v1006 = vunpack.c.l.b16 %v935
        %v1007 = vunpack.c.l.b16 %v936
        %v1008 = vunpack.c.l.b16 %v937
        %v1009 = vunpack.c.l.b16 %v938
        %v1010 = vpack.c.b16 %v979, %v978
        %v1011 = vpack.c.b16 %v981, %v980
        %v1012 = vpack.c.b16 %v983, %v982
        %v1013 = vpack.c.b16 %v985, %v984
        %v1014 = vpack.c.b16 %v987, %v986
        %v1015 = vpack.c.b16 %v989, %v988
        %v1016 = vpack.c.b16 %v991, %v990
        %v1017 = vpack.c.b16 %v993, %v992
        %v1018 = vpack.c.b16 %v995, %v994
        %v1019 = vpack.c.b16 %v997, %v996
        %v1020 = vpack.c.b16 %v999, %v998
        %v1021 = vpack.c.b16 %v1001, %v1000
        %v1022 = vpack.c.b16 %v1003, %v1002
        %v1023 = vpack.c.b16 %v1005, %v1004
        %v1024 = vpack.c.b16 %v1007, %v1006
        %v1025 = vpack.c.b16 %v1009, %v1008
        %1042 = vmatprep.subr.bf16.mxu0 0
        %1043 = vmatpush1.bf16.msra.mxu0 %v1010
        %1044 = vmatprep.subr.bf16.mxu0 0
        %1045 = vmatpush1.bf16.msra.mxu0 %v1011
        %1046 = vmatprep.subr.bf16.mxu0 0
        %1047 = vmatpush1.bf16.msra.mxu0 %v1012
        %1048 = vmatprep.subr.bf16.mxu0 0
        %1049 = vmatpush1.bf16.msra.mxu0 %v1013
        %1050 = vmatprep.subr.bf16.mxu0 0
        %1051 = vmatpush1.bf16.msra.mxu0 %v1014
        %1052 = vmatprep.subr.bf16.mxu0 0
        %1053 = vmatpush1.bf16.msra.mxu0 %v1015
        %1054 = vmatprep.subr.bf16.mxu0 0
        %1055 = vmatpush1.bf16.msra.mxu0 %v1016
        %1056 = vmatprep.subr.bf16.mxu0 0
        %1057 = vmatpush1.bf16.msra.mxu0 %v1017
        %1058 = vmatprep.subr.bf16.mxu0 0
        %1059 = vmatpush1.bf16.msra.mxu0 %v1018
        %1060 = vmatprep.subr.bf16.mxu0 0
        %1061 = vmatpush1.bf16.msra.mxu0 %v1019
        %1062 = vmatprep.subr.bf16.mxu0 0
        %1063 = vmatpush1.bf16.msra.mxu0 %v1020
        %1064 = vmatprep.subr.bf16.mxu0 0
        %1065 = vmatpush1.bf16.msra.mxu0 %v1021
        %1066 = vmatprep.subr.bf16.mxu0 0
        %1067 = vmatpush1.bf16.msra.mxu0 %v1022
        %1068 = vmatprep.subr.bf16.mxu0 0
        %1069 = vmatpush1.bf16.msra.mxu0 %v1023
        %1070 = vmatprep.subr.bf16.mxu0 0
        %1071 = vmatpush1.bf16.msra.mxu0 %v1024
        %1072 = vmatprep.subr.bf16.mxu0 0
        %1073 = vmatpush1.bf16.msra.mxu0 %v1025
        %1074 = vmatprep.mubr.bf16.mxu0 %v892
        %1075 = vmatmul.mubr.bf16.gmra.mrb[0].mxu0 %v891
        %v1076 = vpop.f32.mrb[0].mxu0
        %v1077 = vadd.f32 %v944, %v1076
        %v1078 = vpop.f32.mrb[0].mxu0
        %v1079 = vpop.f32.mrb[0].mxu0
        %v1080 = vadd.f32 %v944, %v1079
        %v1081 = vpop.f32.mrb[0].mxu0
        %1082 = vmatprep.mubr.bf16.mxu0 %v894
        %1083 = vmatmul.mubr.bf16.gmra.mrb[0].mxu0 %v893
        %v1084 = vpop.f32.mrb[0].mxu0
        %v1085 = vadd.f32 %v944, %v1084
        %v1086 = vpop.f32.mrb[0].mxu0
        %v1087 = vpop.f32.mrb[0].mxu0
        %v1088 = vadd.f32 %v944, %v1087
        %v1089 = vpop.f32.mrb[0].mxu0
        %1090 = vmatprep.mubr.bf16.mxu0 %v896
        %1091 = vmatmul.mubr.bf16.gmra.mrb[0].mxu0 %v895
        %v1092 = vpop.f32.mrb[0].mxu0
        %v1093 = vadd.f32 %v944, %v1092
        %v1094 = vpop.f32.mrb[0].mxu0
        %v1095 = vpop.f32.mrb[0].mxu0
        %v1096 = vadd.f32 %v944, %v1095
        %v1097 = vpop.f32.mrb[0].mxu0
        %1098 = vmatprep.mubr.bf16.mxu0 %v898
        %1099 = vmatmul.mubr.bf16.gmra.mrb[0].mxu0 %v897
        %v1100 = vpop.f32.mrb[0].mxu0
        %v1101 = vadd.f32 %v944, %v1100
        %v1102 = vpop.f32.mrb[0].mxu0
        %v1103 = vpop.f32.mrb[0].mxu0
        %v1104 = vadd.f32 %v944, %v1103
        %v1105 = vpop.f32.mrb[0].mxu0
        %1106 = vmatprep.mubr.bf16.mxu0 %v900
        %1107 = vmatmul.mubr.bf16.gmra.mrb[0].mxu0 %v899
        %v1108 = vpop.f32.mrb[0].mxu0
        %v1109 = vadd.f32 %v944, %v1108
        %v1110 = vpop.f32.mrb[0].mxu0
        %v1111 = vpop.f32.mrb[0].mxu0
        %v1112 = vadd.f32 %v944, %v1111
        %v1113 = vpop.f32.mrb[0].mxu0
        %1114 = vmatprep.mubr.bf16.mxu0 %v902
        %1115 = vmatmul.mubr.bf16.gmra.mrb[0].mxu0 %v901
        %v1116 = vpop.f32.mrb[0].mxu0
        %v1117 = vadd.f32 %v944, %v1116
        %v1118 = vpop.f32.mrb[0].mxu0
        %v1119 = vpop.f32.mrb[0].mxu0
        %v1120 = vadd.f32 %v944, %v1119
        %v1121 = vpop.f32.mrb[0].mxu0
        %1122 = vmatprep.mubr.bf16.mxu0 %v904
        %1123 = vmatmul.mubr.bf16.gmra.mrb[0].mxu0 %v903
        %v1124 = vpop.f32.mrb[0].mxu0
        %v1125 = vadd.f32 %v944, %v1124
        %v1126 = vpop.f32.mrb[0].mxu0
        %v1127 = vpop.f32.mrb[0].mxu0
        %v1128 = vadd.f32 %v944, %v1127
        %v1129 = vpop.f32.mrb[0].mxu0
        %1130 = vmatprep.mubr.bf16.mxu0 %v906
        %1131 = vmatmul.mubr.bf16.gmra.mrb[0].mxu0 %v905
        %v1132 = vpop.f32.mrb[0].mxu0
        %v1133 = vadd.f32 %v944, %v1132
        %v1134 = vpop.f32.mrb[0].mxu0
        %v1135 = vpop.f32.mrb[0].mxu0
        %v1136 = vadd.f32 %v944, %v1135
        %v1137 = vpop.f32.mrb[0].mxu0
        %1138 = vdwg.mxu0
        %v1139 = vlaneseq
        %v1140 = vand.u32 %v1139, 127
        %vm1141 = vcmp.lt.s32.totalorder %v1140, 8
        %v1142 = vsel %vm1141, %v1077, -inf
        %v1143 = vsel %vm1141, %v1080, -inf
        %v1144 = vsel %vm1141, %v1085, -inf
        %v1145 = vsel %vm1141, %v1088, -inf
        %v1146 = vsel %vm1141, %v1093, -inf
        %v1147 = vsel %vm1141, %v1096, -inf
        %v1148 = vsel %vm1141, %v1101, -inf
        %v1149 = vsel %vm1141, %v1104, -inf
        %v1150 = vsel %vm1141, %v1109, -inf
        %v1151 = vsel %vm1141, %v1112, -inf
        %v1152 = vsel %vm1141, %v1117, -inf
        %v1153 = vsel %vm1141, %v1120, -inf
        %v1154 = vsel %vm1141, %v1125, -inf
        %v1155 = vsel %vm1141, %v1128, -inf
        %v1156 = vsel %vm1141, %v1133, -inf
        %v1157 = vsel %vm1141, %v1136, -inf
        %1158 = vmax.xlane.f32.xlu0 %v1142
        %v1159 = vpop.xlane.xlu0 %1158
        %1160 = vmax.xlane.f32.xlu0 %v1143
        %v1161 = vpop.xlane.xlu0 %1160
        %1162 = vmax.xlane.f32.xlu0 %v1144
        %v1163 = vpop.xlane.xlu0 %1162
        %1164 = vmax.xlane.f32.xlu0 %v1145
        %v1165 = vpop.xlane.xlu0 %1164
        %1166 = vmax.xlane.f32.xlu0 %v1146
        %v1167 = vpop.xlane.xlu0 %1166
        %1168 = vmax.xlane.f32.xlu0 %v1147
        %v1169 = vpop.xlane.xlu0 %1168
        %1170 = vmax.xlane.f32.xlu0 %v1148
        %v1171 = vpop.xlane.xlu0 %1170
        %1172 = vmax.xlane.f32.xlu0 %v1149
        %v1173 = vpop.xlane.xlu0 %1172
        %1174 = vmax.xlane.f32.xlu0 %v1150
        %v1175 = vpop.xlane.xlu0 %1174
        %1176 = vmax.xlane.f32.xlu0 %v1151
        %v1177 = vpop.xlane.xlu0 %1176
        %1178 = vmax.xlane.f32.xlu0 %v1152
        %v1179 = vpop.xlane.xlu0 %1178
        %1180 = vmax.xlane.f32.xlu0 %v1153
        %v1181 = vpop.xlane.xlu0 %1180
        %1182 = vmax.xlane.f32.xlu0 %v1154
        %v1183 = vpop.xlane.xlu0 %1182
        %1184 = vmax.xlane.f32.xlu0 %v1155
        %v1185 = vpop.xlane.xlu0 %1184
        %1186 = vmax.xlane.f32.xlu0 %v1156
        %v1187 = vpop.xlane.xlu0 %1186
        %1188 = vmax.xlane.f32.xlu0 %v1157
        %v1189 = vpop.xlane.xlu0 %1188
        %v1190 = vsub.f32 %v1142, %v1159
        %v1191 = vsub.f32 %v1143, %v1161
        %v1192 = vsub.f32 %v1144, %v1163
        %v1193 = vsub.f32 %v1145, %v1165
        %v1194 = vsub.f32 %v1146, %v1167
        %v1195 = vsub.f32 %v1147, %v1169
        %v1196 = vsub.f32 %v1148, %v1171
        %v1197 = vsub.f32 %v1149, %v1173
        %v1198 = vsub.f32 %v1150, %v1175
        %v1199 = vsub.f32 %v1151, %v1177
        %v1200 = vsub.f32 %v1152, %v1179
        %v1201 = vsub.f32 %v1153, %v1181
        %v1202 = vsub.f32 %v1154, %v1183
        %v1203 = vsub.f32 %v1155, %v1185
        %v1204 = vsub.f32 %v1156, %v1187
        %v1205 = vsub.f32 %v1157, %v1189
        %v1206 = vmul.f32 %v1190, 1.442695
        %v1207 = vpow.pop %v1206
        %v1208 = vmul.f32 %v1191, 1.442695
        %v1209 = vpow.pop %v1208
        %v1210 = vmul.f32 %v1192, 1.442695
        %v1211 = vpow.pop %v1210
        %v1212 = vmul.f32 %v1193, 1.442695
        %v1213 = vpow.pop %v1212
        %v1214 = vmul.f32 %v1194, 1.442695
        %v1215 = vpow.pop %v1214
        %v1216 = vmul.f32 %v1195, 1.442695
        %v1217 = vpow.pop %v1216
        %v1218 = vmul.f32 %v1196, 1.442695
        %v1219 = vpow.pop %v1218
        %v1220 = vmul.f32 %v1197, 1.442695
        %v1221 = vpow.pop %v1220
        %v1222 = vmul.f32 %v1198, 1.442695
        %v1223 = vpow.pop %v1222
        %v1224 = vmul.f32 %v1199, 1.442695
        %v1225 = vpow.pop %v1224
        %v1226 = vmul.f32 %v1200, 1.442695
        %v1227 = vpow.pop %v1226
        %v1228 = vmul.f32 %v1201, 1.442695
        %v1229 = vpow.pop %v1228
        %v1230 = vmul.f32 %v1202, 1.442695
        %v1231 = vpow.pop %v1230
        %v1232 = vmul.f32 %v1203, 1.442695
        %v1233 = vpow.pop %v1232
        %v1234 = vmul.f32 %v1204, 1.442695
        %v1235 = vpow.pop %v1234
        %v1236 = vmul.f32 %v1205, 1.442695
        %v1237 = vpow.pop %v1236
        %1238 = vadd.xlane.f32.xlu0 %v1207
        %v1239 = vpop.xlane.xlu0 %1238
        %1240 = vadd.xlane.f32.xlu0 %v1209
        %v1241 = vpop.xlane.xlu0 %1240
        %1242 = vadd.xlane.f32.xlu0 %v1211
        %v1243 = vpop.xlane.xlu0 %1242
        %1244 = vadd.xlane.f32.xlu0 %v1213
        %v1245 = vpop.xlane.xlu0 %1244
        %1246 = vadd.xlane.f32.xlu0 %v1215
        %v1247 = vpop.xlane.xlu0 %1246
        %1248 = vadd.xlane.f32.xlu0 %v1217
        %v1249 = vpop.xlane.xlu0 %1248
        %1250 = vadd.xlane.f32.xlu0 %v1219
        %v1251 = vpop.xlane.xlu0 %1250
        %1252 = vadd.xlane.f32.xlu0 %v1221
        %v1253 = vpop.xlane.xlu0 %1252
        %1254 = vadd.xlane.f32.xlu0 %v1223
        %v1255 = vpop.xlane.xlu0 %1254
        %1256 = vadd.xlane.f32.xlu0 %v1225
        %v1257 = vpop.xlane.xlu0 %1256
        %1258 = vadd.xlane.f32.xlu0 %v1227
        %v1259 = vpop.xlane.xlu0 %1258
        %1260 = vadd.xlane.f32.xlu0 %v1229
        %v1261 = vpop.xlane.xlu0 %1260
        %1262 = vadd.xlane.f32.xlu0 %v1231
        %v1263 = vpop.xlane.xlu0 %1262
        %1264 = vadd.xlane.f32.xlu0 %v1233
        %v1265 = vpop.xlane.xlu0 %1264
        %1266 = vadd.xlane.f32.xlu0 %v1235
        %v1267 = vpop.xlane.xlu0 %1266
        %1268 = vadd.xlane.f32.xlu0 %v1237
        %v1269 = vpop.xlane.xlu0 %1268
        %v1270 = vrcp.pop %v1239
        %v1271 = vrcp.pop %v1241
        %v1272 = vrcp.pop %v1243
        %v1273 = vrcp.pop %v1245
        %v1274 = vrcp.pop %v1247
        %v1275 = vrcp.pop %v1249
        %v1276 = vrcp.pop %v1251
        %v1277 = vrcp.pop %v1253
        %v1278 = vrcp.pop %v1255
        %v1279 = vrcp.pop %v1257
        %v1280 = vrcp.pop %v1259
        %v1281 = vrcp.pop %v1261
        %v1282 = vrcp.pop %v1263
        %v1283 = vrcp.pop %v1265
        %v1284 = vrcp.pop %v1267
        %v1285 = vrcp.pop %v1269
        %v1286 = vmul.f32 %v1207, %v1270
        %v1287 = vmul.f32 %v1209, %v1271
        %v1288 = vmul.f32 %v1211, %v1272
        %v1289 = vmul.f32 %v1213, %v1273
        %v1290 = vmul.f32 %v1215, %v1274
        %v1291 = vmul.f32 %v1217, %v1275
        %v1292 = vmul.f32 %v1219, %v1276
        %v1293 = vmul.f32 %v1221, %v1277
        %v1294 = vmul.f32 %v1223, %v1278
        %v1295 = vmul.f32 %v1225, %v1279
        %v1296 = vmul.f32 %v1227, %v1280
        %v1297 = vmul.f32 %v1229, %v1281
        %v1298 = vmul.f32 %v1231, %v1282
        %v1299 = vmul.f32 %v1233, %v1283
        %v1300 = vmul.f32 %v1235, %v1284
        %v1301 = vmul.f32 %v1237, %v1285
        %1302 = vst [vmem:[%s287] sm:$0xff] %v1286
        %1303 = vst [vmem:[%s287 + $0x8] sm:$0xff] %v1287
        %1304 = vst [vmem:[%s287 + $0x10] sm:$0xff] %v1288
        %1305 = vst [vmem:[%s287 + $0x18] sm:$0xff] %v1289
        %1306 = vst [vmem:[%s287 + $0x20] sm:$0xff] %v1290
        %1307 = vst [vmem:[%s287 + $0x28] sm:$0xff] %v1291
        %1308 = vst [vmem:[%s287 + $0x30] sm:$0xff] %v1292
        %1309 = vst [vmem:[%s287 + $0x38] sm:$0xff] %v1293
        %1310 = vst [vmem:[%s287 + $0x40] sm:$0xff] %v1294
        %1311 = vst [vmem:[%s287 + $0x48] sm:$0xff] %v1295
        %1312 = vst [vmem:[%s287 + $0x50] sm:$0xff] %v1296
        %1313 = vst [vmem:[%s287 + $0x58] sm:$0xff] %v1297
        %1314 = vst [vmem:[%s287 + $0x60] sm:$0xff] %v1298
        %1315 = vst [vmem:[%s287 + $0x68] sm:$0xff] %v1299
        %1316 = vst [vmem:[%s287 + $0x70] sm:$0xff] %v1300
        %1317 = vst [vmem:[%s287 + $0x78] sm:$0xff] %v1301
        %s1318 = sand.u32 %s182, 1
        %s1319 = scalar_lea.sflag [#allocation4], %s1318
        %s1320 = sand.u32 %s182, 1
        %s1321 = smul.addr %s1320, 128
        %s1322 = scalar_lea.vmem [#allocation5], %s1321
        // Predicated region
        $region53: #{tpu_custom_call.1} parent=47 // pred_check
          %p1323 = pneg %p192
        $region54: #{tpu_custom_call.1} parent=47 // pred_check_branch
          %1325 = sbr.rel (%p1323) target = $region56
        $region55: #{tpu_custom_call.1} parent=47 // pred_region
          %s1326 = smul.u32 16, %s22
          %s1328 = ssub.s32 2048, 2048
          %1329 = vsyncadd %s1319, %s1328
          %s1330 = smul.addr %s1326, 128
          %s1331 = scalar_lea.hbm %s7, %s1330
          %s1332 = sshll.u32 %s1322, 4
          %s1333 = int_to_ptr.vmem [resolvable:$true] %s1332
          %1338 = dma.vmem_to_hbm [thread:$0]  %s1333, 2048, %s1331, %s1319, 128, 128, 8
        $region56: #{tpu_custom_call.1} parent=47 // pred_fallthru
          _
      $region48: #{tpu_custom_call.1} parent=5 // pred_fallthru
        _
      %p1339 = scmp.le.s32.totalorder 2, %s17
      // Predicated region
      $region57: #{tpu_custom_call.1} parent=5 // pred_check
        %p1340 = pneg %p1339
      $region58: #{tpu_custom_call.1} parent=5 // pred_check_branch
        %1342 = sbr.rel (%p1340) target = $region60
      $region59: #{tpu_custom_call.1} parent=5 // pred_region
        %s1343 = ssub.s32 %s17, 2
        // Predicated region
        $region61: #{tpu_custom_call.1} parent=59 // pred_check
          %p1344 = pneg %p198
        $region62: #{tpu_custom_call.1} parent=59 // pred_check_branch
          %1346 = sbr.rel (%p1344) target = $region64
        $region63: #{tpu_custom_call.1} parent=59 // pred_region
          %s1347 = sand.u32 %s183, 1
          %s1348 = scalar_lea.sflag [#allocation4], %s1347
          %s1349 = sand.u32 %s183, 1
          %s1350 = smul.addr %s1349, 128
          %s1351 = scalar_lea.vmem [#allocation5], %s1350
          %1352 = dma.done %s1348, 2048
        $region64: #{tpu_custom_call.1} parent=59 // pred_fallthru
          _
      $region60: #{tpu_custom_call.1} parent=5 // pred_fallthru
        _
    $region6: #{tpu_custom_call.1} parent=1 // loop_footer
      %s21 = sadd.s32 1, %s17
    $region7: #{tpu_custom_call.1} parent=1 // loop_footer_branch
      %16 = sbr.rel target = $region3
    $region8: #{tpu_custom_call.1} parent=1 // loop_exit
      _
    %1353 = vsyncpa [#allocation3], 1
    %s1354 = scalar_lea.sflag [#allocation3], 1
    %1355 = vsyncpa %s1354, 1
    %1356 = vsyncpa [#allocation4], 1
    %s1357 = scalar_lea.sflag [#allocation4], 1
    %1358 = vsyncpa %s1357, 1

</llo_original>
